<compile_context>
chip_gen: v6e
topology: v6e:2x2x1
jax: 0.10.0
libtpu: 0.0.40
codegen_flags: <defaults>
</compile_context>

<pallas_src>
import jax
import jax.numpy as jnp
from jax import lax
from jax.experimental import pallas as pl
from jax.experimental.pallas import tpu as pltpu


def attn_kernel(xq_ref, xkv_ref, aqk_ref, u_ref, wv_ref, bv_ref, gamma_ref, o_ref):
    f32 = jnp.float32
    bf16 = jnp.bfloat16

    x_q = xq_ref[0]                          # (C, TQ) f32 — query tile, also the residual
    x_kv = xkv_ref[0].astype(bf16)           # (C, N)  bf16 — key/value source (MXU operand)

    # Folded query projection in (TQ, C) orientation: one tiny f32 transpose so that
    # every matmul below is in natural MXU form (no in-kernel weight transposes).
    xq_t = jnp.transpose(x_q, (1, 0)).astype(bf16)                         # (TQ, C)
    qf = jnp.dot(xq_t, aqk_ref[...], preferred_element_type=f32) + u_ref[...]  # (TQ, C) f32

    # Scores: (TQ, N), contraction depth C (8x deeper than the unfused C/8 QK^T).
    s = jnp.dot(qf.astype(bf16), x_kv, preferred_element_type=f32)

    # Row softmax in f32 (VPU/XLU); approx reciprocal goes to the otherwise-idle EUP slot.
    m = jnp.max(s, axis=-1, keepdims=True)
    p = jnp.exp(s - m)
    l = jnp.sum(p, axis=-1, keepdims=True)
    attn = p * pl.reciprocal(l, approx=True)                               # (TQ, N) f32
    # TODO(synk): training-mode attention dropout would mask `attn` here (eval => identity).

    # Context: ctx[c, i] = sum_j x[c, j] * attn[i, j]  -> (C, TQ), lane-dense.
    ctx = lax.dot_general(
        x_kv, attn.astype(bf16),
        dimension_numbers=(((1,), (1,)), ((), ())),
        preferred_element_type=f32)

    # Value 1x1 conv applied to the context; bv adds exactly since attn rows sum to 1.
    out = jnp.dot(wv_ref[...], ctx.astype(bf16), preferred_element_type=f32) + bv_ref[...]

    o_ref[0] = (gamma_ref[0] * out + x_q).astype(o_ref.dtype)


def enhanced_self_attention(x_nchw, wq, bq, wk, bk, wv, bv, gamma, *, tq=None):
    """x_nchw: (B, C, H, W) f32. 1x1-conv weights as (Cout, Cin); biases (Cout,)."""
    B, C, H, W = x_nchw.shape
    N = H * W
    x_cn = x_nchw.reshape(B, C, N)                        # channel-major; free reshape

    # Fold query/key 1x1 convs (softmax-invariant terms dropped — see header comment).
    a_qk = (wq.T @ wk).astype(jnp.bfloat16)               # (C, C)  = Wq^T Wk, MXU operand
    u_row = (bq @ wk).reshape(1, C).astype(jnp.float32)   # (1, C)  = (Wk^T bq)^T, f32 bias
    del bk                                                # constant along softmax axis -> cancels
    wv_b = wv.astype(jnp.bfloat16)                        # (C, C)  MXU operand
    bv_col = bv.reshape(C, 1).astype(jnp.float32)         # (C, 1)
    gamma_s = gamma.reshape(1).astype(jnp.float32)        # SMEM scalar

    # Lane-aligned query tile. TQ=128 keeps the (TQ, N) score tile well inside the v7x
    # 64 MiB VMEM budget; bump to 256 on v5e/v6e for very large N if DMA-overhead-bound.
    if tq is None:
        tq = 128 if N % 128 == 0 else N
    num_q = N // tq

    out_cn = pl.pallas_call(
        attn_kernel,
        out_shape=jax.ShapeDtypeStruct((B, C, N), x_cn.dtype),
        grid_spec=pltpu.PrefetchScalarGridSpec(
            num_scalar_prefetch=0,
            grid=(B, num_q),
            in_specs=[
                pl.BlockSpec((1, C, tq), lambda b, q: (b, 0, q)),   # x query tile
                pl.BlockSpec((1, C, N), lambda b, q: (b, 0, 0)),    # x full row (K/V source)
                pl.BlockSpec((C, C), lambda b, q: (0, 0)),          # Wq^T Wk  (bf16)
                pl.BlockSpec((1, C), lambda b, q: (0, 0)),          # Wk^T bq  (f32)
                pl.BlockSpec((C, C), lambda b, q: (0, 0)),          # Wv       (bf16)
                pl.BlockSpec((C, 1), lambda b, q: (0, 0)),          # bv       (f32)
                pl.BlockSpec(memory_space=pltpu.MemorySpace.SMEM),  # gamma scalar
            ],
            out_specs=pl.BlockSpec((1, C, tq), lambda b, q: (b, 0, q)),
        ),
        compiler_params=pltpu.CompilerParams(
            dimension_semantics=("parallel", "parallel")),
    )(x_cn, x_cn, a_qk, u_row, wv_b, bv_col, gamma_s)

    return out_cn.reshape(B, C, H, W)


def reference(x_nchw, wq, bq, wk, bk, wv, bv, gamma):
    """Pure-JAX f32 reference mirroring the PyTorch forward (eval mode)."""
    B, C, H, W = x_nchw.shape
    N = H * W
    xf = x_nchw.reshape(B, C, N)                                      # (B, C, N)
    q = jnp.einsum('oc,bcn->bon', wq, xf) + bq[None, :, None]         # (B, C8, N)
    k = jnp.einsum('oc,bcn->bon', wk, xf) + bk[None, :, None]
    v = jnp.einsum('oc,bcn->bon', wv, xf) + bv[None, :, None]         # (B, C, N)
    attn = jax.nn.softmax(jnp.einsum('bcn,bcm->bnm', q, k), axis=-1)  # (B, N, N)
    out = jnp.einsum('bcm,bnm->bcn', v, attn).reshape(B, C, H, W)
    return gamma[0] * out + x_nchw


if __name__ == "__main__":
    key = jax.random.PRNGKey(0)
    B, C, H, W = 2, 16, 16, 16          # C must be divisible by 8 (C//8 q/k channels)
    C8 = C // 8

    ks = jax.random.split(key, 7)
    x = jax.random.normal(ks[0], (B, C, H, W), jnp.float32)
    wq = jax.random.normal(ks[1], (C8, C), jnp.float32) * 0.1
    bq = jax.random.normal(ks[2], (C8,), jnp.float32) * 0.1
    wk = jax.random.normal(ks[3], (C8, C), jnp.float32) * 0.1
    bk = jax.random.normal(ks[4], (C8,), jnp.float32) * 0.1
    wv = jax.random.normal(ks[5], (C, C), jnp.float32) * 0.1
    bv = jax.random.normal(ks[6], (C,), jnp.float32) * 0.1
    gamma = jnp.ones((1,), jnp.float32)          # nn.Parameter(torch.ones(1))

    y = enhanced_self_attention(x, wq, bq, wk, bk, wv, bv, gamma)
    y = jax.block_until_ready(y)

    y_ref = reference(x, wq, bq, wk, bk, wv, bv, gamma)
    assert y.shape == (B, C, H, W)
    # Tolerance sized for bf16 MXU operands + approx EUP reciprocal vs the f32 reference.
    assert jnp.allclose(y, y_ref, atol=3e-2, rtol=3e-2), "mismatch vs reference"

    print("KERNEL_OK")
</pallas_src>

<mosaic_0001>
module attributes {stable_mosaic.version = 11 : i64} {
  func.func @attn_kernel(%arg0: i32, %arg1: i32, %arg2: memref<1x16x128xf32, #tpu.memory_space<vmem>>, %arg3: memref<1x16x256xf32, #tpu.memory_space<vmem>>, %arg4: memref<16x16xbf16, #tpu.memory_space<vmem>>, %arg5: memref<1x16xf32, #tpu.memory_space<vmem>>, %arg6: memref<16x16xbf16, #tpu.memory_space<vmem>>, %arg7: memref<16x1xf32, #tpu.memory_space<vmem>>, %arg8: memref<1xf32, #tpu.memory_space<smem>>, %arg9: memref<1x16x128xf32, #tpu.memory_space<vmem>>) attributes {dimension_semantics = [#tpu.dimension_semantics<parallel>, #tpu.dimension_semantics<parallel>], iteration_bounds = array<i64: 2, 2>, scalar_prefetch = 0 : i64, scratch_operands = 0 : i64, tpu.core_type = #tpu.core_type<tc>, window_params = [{transform_indices = @transform_0, window_bounds = array<i64: 1, 16, 128>}, {transform_indices = @transform_1, window_bounds = array<i64: 1, 16, 256>}, {pipeline_mode = #tpu.pipeline_mode<synchronous>, transform_indices = @transform_2, window_bounds = array<i64: 16, 16>}, {pipeline_mode = #tpu.pipeline_mode<synchronous>, transform_indices = @transform_3, window_bounds = array<i64: 1, 16>}, {pipeline_mode = #tpu.pipeline_mode<synchronous>, transform_indices = @transform_4, window_bounds = array<i64: 16, 16>}, {pipeline_mode = #tpu.pipeline_mode<synchronous>, transform_indices = @transform_5, window_bounds = array<i64: 16, 1>}, {transform_indices = @transform_6, window_bounds = array<i64: 1>}, {transform_indices = @transform_7, window_bounds = array<i64: 1, 16, 128>}]} {
    %c0 = arith.constant 0 : index
    %c0_0 = arith.constant 0 : index
    %c0_1 = arith.constant 0 : index
    %0 = vector.load %arg2[%c0, %c0_0, %c0_1] : memref<1x16x128xf32, #tpu.memory_space<vmem>>, vector<1x16x128xf32>
    %1 = vector.shape_cast %0 : vector<1x16x128xf32> to vector<16x128xf32>
    %c0_2 = arith.constant 0 : index
    %c0_3 = arith.constant 0 : index
    %c0_4 = arith.constant 0 : index
    %2 = vector.load %arg3[%c0_2, %c0_3, %c0_4] : memref<1x16x256xf32, #tpu.memory_space<vmem>>, vector<1x16x256xf32>
    %3 = vector.shape_cast %2 : vector<1x16x256xf32> to vector<16x256xf32>
    %4 = arith.truncf %3 : vector<16x256xf32> to vector<16x256xbf16>
    %5 = tpu.transpose %1, [1, 0] : vector<16x128xf32> -> vector<128x16xf32>
    %6 = arith.truncf %5 : vector<128x16xf32> to vector<128x16xbf16>
    %c0_5 = arith.constant 0 : index
    %c0_6 = arith.constant 0 : index
    %7 = vector.load %arg4[%c0_5, %c0_6] : memref<16x16xbf16, #tpu.memory_space<vmem>>, vector<16x16xbf16>
    %cst = arith.constant dense<0.000000e+00> : vector<128x16xf32>
    %8 = tpu.matmul %6, %7, %cst {dimension_numbers = #tpu.dot_dimension_numbers<[1], [0], [0], [1], [0, 0, 1, 1], [], []>} : vector<128x16xbf16>, vector<16x16xbf16>, vector<128x16xf32> -> vector<128x16xf32>
    %c0_7 = arith.constant 0 : index
    %c0_8 = arith.constant 0 : index
    %9 = vector.load %arg5[%c0_7, %c0_8] : memref<1x16xf32, #tpu.memory_space<vmem>>, vector<1x16xf32>
    %10 = vector.broadcast %9 : vector<1x16xf32> to vector<128x16xf32>
    %11 = arith.addf %8, %10 : vector<128x16xf32>
    %12 = arith.truncf %11 : vector<128x16xf32> to vector<128x16xbf16>
    %cst_9 = arith.constant dense<0.000000e+00> : vector<128x256xf32>
    %13 = tpu.matmul %12, %4, %cst_9 {dimension_numbers = #tpu.dot_dimension_numbers<[1], [0], [0], [1], [0, 0, 1, 1], [], []>} : vector<128x16xbf16>, vector<16x256xbf16>, vector<128x256xf32> -> vector<128x256xf32>
    %cst_10 = arith.constant dense<0xFF800000> : vector<128xf32>
    %14 = vector.multi_reduction <maximumf>, %13, %cst_10 [1] : vector<128x256xf32> to vector<128xf32>
    %15 = vector.shape_cast %14 : vector<128xf32> to vector<128x1xf32>
    %16 = vector.broadcast %15 : vector<128x1xf32> to vector<128x256xf32>
    %17 = arith.subf %13, %16 : vector<128x256xf32>
    %18 = math.exp %17 : vector<128x256xf32>
    %cst_11 = arith.constant dense<0.000000e+00> : vector<128xf32>
    %19 = vector.multi_reduction <add>, %18, %cst_11 [1] : vector<128x256xf32> to vector<128xf32>
    %20 = vector.shape_cast %19 : vector<128xf32> to vector<128x1xf32>
    %21 = tpu.reciprocal %20 {approx = true} : vector<128x1xf32> -> vector<128x1xf32>
    %22 = vector.broadcast %21 : vector<128x1xf32> to vector<128x256xf32>
    %23 = arith.mulf %18, %22 : vector<128x256xf32>
    %24 = arith.truncf %23 : vector<128x256xf32> to vector<128x256xbf16>
    %cst_12 = arith.constant dense<0.000000e+00> : vector<16x128xf32>
    %25 = tpu.matmul %4, %24, %cst_12 {dimension_numbers = #tpu.dot_dimension_numbers<[1], [1], [0], [0], [0, 0, 1, 0], [], []>} : vector<16x256xbf16>, vector<128x256xbf16>, vector<16x128xf32> -> vector<16x128xf32>
    %c0_13 = arith.constant 0 : index
    %c0_14 = arith.constant 0 : index
    %26 = vector.load %arg6[%c0_13, %c0_14] : memref<16x16xbf16, #tpu.memory_space<vmem>>, vector<16x16xbf16>
    %27 = arith.truncf %25 : vector<16x128xf32> to vector<16x128xbf16>
    %cst_15 = arith.constant dense<0.000000e+00> : vector<16x128xf32>
    %28 = tpu.matmul %26, %27, %cst_15 {dimension_numbers = #tpu.dot_dimension_numbers<[1], [0], [0], [1], [0, 0, 1, 1], [], []>} : vector<16x16xbf16>, vector<16x128xbf16>, vector<16x128xf32> -> vector<16x128xf32>
    %c0_16 = arith.constant 0 : index
    %c0_17 = arith.constant 0 : index
    %29 = vector.load %arg7[%c0_16, %c0_17] : memref<16x1xf32, #tpu.memory_space<vmem>>, vector<16x1xf32>
    %30 = vector.broadcast %29 : vector<16x1xf32> to vector<16x128xf32>
    %31 = arith.addf %28, %30 : vector<16x128xf32>
    %c0_18 = arith.constant 0 : index
    %32 = memref.load %arg8[%c0_18] : memref<1xf32, #tpu.memory_space<smem>>
    %33 = vector.broadcast %32 : f32 to vector<16x128xf32>
    %34 = arith.mulf %33, %31 : vector<16x128xf32>
    %35 = arith.addf %34, %1 : vector<16x128xf32>
    %c0_19 = arith.constant 0 : index
    %c0_20 = arith.constant 0 : index
    %c0_21 = arith.constant 0 : index
    %36 = vector.load %arg9[%c0_19, %c0_20, %c0_21] : memref<1x16x128xf32, #tpu.memory_space<vmem>>, vector<1x16x128xf32>
    %37 = vector.shape_cast %36 : vector<1x16x128xf32> to vector<16x128xf32>
    %38 = vector.shape_cast %35 : vector<16x128xf32> to vector<1x16x128xf32>
    tpu.vector_store %arg9[%c0_19, %c0_20, %c0_21], %38 {strides = array<i32>} : memref<1x16x128xf32, #tpu.memory_space<vmem>>, vector<1x16x128xf32>,
    return
  }
  func.func @transform_0(%arg0: i32, %arg1: i32) -> (i32, i32, i32) {
    %c0_i32 = arith.constant 0 : i32
    %c0_i32_0 = arith.constant 0 : i32
    return %arg0, %c0_i32, %arg1 : i32, i32, i32
  }
  func.func @transform_1(%arg0: i32, %arg1: i32) -> (i32, i32, i32) {
    %c0_i32 = arith.constant 0 : i32
    %c0_i32_0 = arith.constant 0 : i32
    %c0_i32_1 = arith.constant 0 : i32
    return %arg0, %c0_i32, %c0_i32_0 : i32, i32, i32
  }
  func.func @transform_2(%arg0: i32, %arg1: i32) -> (i32, i32) {
    %c0_i32 = arith.constant 0 : i32
    %c0_i32_0 = arith.constant 0 : i32
    %c0_i32_1 = arith.constant 0 : i32
    return %c0_i32, %c0_i32_0 : i32, i32
  }
  func.func @transform_3(%arg0: i32, %arg1: i32) -> (i32, i32) {
    %c0_i32 = arith.constant 0 : i32
    %c0_i32_0 = arith.constant 0 : i32
    %c0_i32_1 = arith.constant 0 : i32
    return %c0_i32, %c0_i32_0 : i32, i32
  }
  func.func @transform_4(%arg0: i32, %arg1: i32) -> (i32, i32) {
    %c0_i32 = arith.constant 0 : i32
    %c0_i32_0 = arith.constant 0 : i32
    %c0_i32_1 = arith.constant 0 : i32
    return %c0_i32, %c0_i32_0 : i32, i32
  }
  func.func @transform_5(%arg0: i32, %arg1: i32) -> (i32, i32) {
    %c0_i32 = arith.constant 0 : i32
    %c0_i32_0 = arith.constant 0 : i32
    %c0_i32_1 = arith.constant 0 : i32
    return %c0_i32, %c0_i32_0 : i32, i32
  }
  func.func @transform_6(%arg0: i32, %arg1: i32) -> i32 {
    %c0_i32 = arith.constant 0 : i32
    %c0_i32_0 = arith.constant 0 : i32
    return %c0_i32 : i32
  }
  func.func @transform_7(%arg0: i32, %arg1: i32) -> (i32, i32, i32) {
    %c0_i32 = arith.constant 0 : i32
    %c0_i32_0 = arith.constant 0 : i32
    return %arg0, %c0_i32, %arg1 : i32, i32, i32
  }
}

</mosaic_0001>

<llo_original>
// kernel: tpu_custom_call.1
$region0: #{tpu_custom_call.1}
  #allocation0 [shape = 'u32[]', space=smem, size = 0x4, offset = 0x4, fixed_abs, tag = 'smem constant byte address 0x4 - core index']
  #allocation1 [shape = 'u32[144,128]{1,0:T(1,128)}', space=vmem, size = 0x12000, scoped, tag = 'internal scratch']
  #allocation2 [shape = 'f32[1]{0:T(128)S(6)}', space=smem, size = 0x200, scoped, tag = 'scoped memory for tpu_custom_call.1']
  %s0 = inlined_call_operand.hbm [shape: f32[2,16,256], index: 0, kind: input, shape index: {}]
  %s1 = inlined_call_operand.hbm [shape: f32[2,16,256], index: 1, kind: input, shape index: {}]
  %s2 = inlined_call_operand.vmem [shape: bf16[16,16], index: 2, kind: input, shape index: {}]
  %s3 = inlined_call_operand.vmem [shape: f32[1,16], index: 3, kind: input, shape index: {}]
  %s4 = inlined_call_operand.vmem [shape: bf16[16,16], index: 4, kind: input, shape index: {}]
  %s5 = inlined_call_operand.vmem [shape: f32[16,1], index: 5, kind: input, shape index: {}]
  %s6 = inlined_call_operand.<no memory space> [shape: f32[1], index: 6, kind: input, shape index: {}]
  %s7 = inlined_call_operand.hbm [shape: f32[2,16,256], index: 7, kind: output, shape index: {}]
  %s8 = sld [smem:[#allocation0]]
  $region69: #{tpu_custom_call.1} parent=0
    _
  %s10 = ssub.s32 1, %s8
  %s11 = scalar_select 0, %s10, %s8
  %12 = sst [smem:[#allocation2]] %s6
  $region1: #{tpu_custom_call.1} parent=0
    #allocation3 [shape = 'u8[16384]{0}', space=vmem, size = 0x4000, scoped, tag = 'input window, operand 0']
    #allocation4 [shape = 's32[2]{0}', space=sflag, size = 0x8, scoped, tag = 'scoped memory for tpu_custom_call.1']
    #allocation5 [shape = 's32[2]{0}', space=sflag, size = 0x8, scoped, tag = 'scoped memory for tpu_custom_call.1']
    #allocation6 [shape = 'u8[32768]{0}', space=vmem, size = 0x8000, scoped, tag = 'input window, operand 1']
    #allocation7 [shape = 's32[2]{0}', space=sflag, size = 0x8, scoped, tag = 'scoped memory for tpu_custom_call.1']
    #allocation8 [shape = 'u8[16384]{0}', space=vmem, size = 0x4000, scoped, tag = 'output window, operand 0']
    %13 = vsyncpa [#allocation4], 0
    %s14 = scalar_lea.sflag [#allocation4], 1
    %15 = vsyncpa %s14, 0
    %16 = vsyncpa [#allocation7], 0
    %s17 = scalar_lea.sflag [#allocation7], 1
    %18 = vsyncpa %s17, 0
    %19 = vsyncpa [#allocation5], 0
    %s20 = scalar_lea.sflag [#allocation5], 1
    %21 = vsyncpa %s20, 0
    loop: start=0, step=1, limit=6
    $region2: #{tpu_custom_call.1} parent=1 // loop_pre_header
      _
    $region3: #{tpu_custom_call.1} parent=1 // loop_header
      %s23 = sphi 0, %s27
      %p24 = scmp.ge.s32.totalorder %s23, 6
      %s30 = sphi 0, %s42
      %s31 = sphi 0, %s38
      %s32 = sphi 0, %s30
      %s33 = sphi 0, %s31
      %s34 = sphi 0, %s32
      %s35 = sphi 0, %s33
      %s47 = sphi 0, %s49
      %s50 = sphi 0, %s47
      %s51 = sphi 0, %s50
      %s67 = sphi 0, %s51
      %s73 = sphi 0, %s75
      %s76 = sphi 0, %s73
      %s77 = sphi 0, %s76
      %s93 = sphi 0, %s77
      %s97 = sphi 0, %s97
      %s99 = sphi 0, %s97
      %s100 = sphi 0, %s99
      %s114 = sphi 0, %s100
      %s118 = sphi 0, %s118
      %s120 = sphi 0, %s118
      %s121 = sphi 0, %s120
      %s135 = sphi 0, %s121
      %s139 = sphi 0, %s139
      %s141 = sphi 0, %s139
      %s142 = sphi 0, %s141
      %s156 = sphi 0, %s142
      %s160 = sphi 0, %s160
      %s162 = sphi 0, %s160
      %s163 = sphi 0, %s162
      %s177 = sphi 0, %s163
      %s181 = sphi 0, %s181
      %s183 = sphi 0, %s181
      %s184 = sphi 0, %s183
      %s198 = sphi 0, %s184
      %s206 = sphi 0, %s208
      %s209 = sphi 0, %s206
      %s210 = sphi 0, %s209
      %s226 = sphi 0, %s210
    $region4: #{tpu_custom_call.1} parent=1 // loop_header_branch
      %26 = sbr.rel (%p24) target = $region8
    $region5: #{tpu_custom_call.1} parent=1 // loop_body
      %s28 = ssub.s32 %s23, 1
      %s29 = ssub.s32 %s23, 2
      %s36 = sadd.s32 1, %s31
      %p37 = scmp.ge.s32.totalorder %s36, 2
      %s38 = scalar_select %p37, 0, %s36
      %s39 = sadd.s32 1, %s30
      %s40 = scalar_select %p37, %s39, %s30
      %p41 = scmp.ge.s32.totalorder %s40, 2
      %s42 = scalar_select %p41, 0, %s40
      %s43 = ssub.s32 %s30, %s42
      %s44 = ssub.s32 %s31, %s38
      %s45 = sor.u32 %s43, %s44
      %p46 = scmp.eq.s32.totalorder %s45, 0
      %s48 = sadd.s32 %s47, 1
      %s49 = scalar_select %p46, %s47, %s48
      %p52 = pneg %p46
      %p53 = scmp.eq.s32.totalorder %s23, 3
      %p54 = por %p52, %p53
      %p55 = scmp.ne.s32.totalorder %s47, %s50
      %p56 = scmp.eq.s32.totalorder %s23, 0
      %p57 = por %p55, %p56
      %p58 = scmp.ne.s32.totalorder %s47, %s50
      %p59 = scmp.eq.s32.totalorder %s28, 3
      %p60 = por %p58, %p59
      %p61 = scmp.ne.s32.totalorder %s50, %s51
      %p62 = scmp.eq.s32.totalorder %s28, 0
      %p63 = por %p61, %p62
      %p64 = scmp.ne.s32.totalorder %s50, %s51
      %p65 = scmp.eq.s32.totalorder %s29, 3
      %p66 = por %p64, %p65
      %p68 = scmp.ne.s32.totalorder %s51, %s67
      %p69 = scmp.eq.s32.totalorder %s29, 0
      %p70 = por %p68, %p69
      %s71 = ssub.s32 %s30, %s42
      %p72 = scmp.eq.s32.totalorder %s71, 0
      %s74 = sadd.s32 %s73, 1
      %s75 = scalar_select %p72, %s73, %s74
      %p78 = pneg %p72
      %p79 = scmp.eq.s32.totalorder %s23, 3
      %p80 = por %p78, %p79
      %p81 = scmp.ne.s32.totalorder %s73, %s76
      %p82 = scmp.eq.s32.totalorder %s23, 0
      %p83 = por %p81, %p82
      %p84 = scmp.ne.s32.totalorder %s73, %s76
      %p85 = scmp.eq.s32.totalorder %s28, 3
      %p86 = por %p84, %p85
      %p87 = scmp.ne.s32.totalorder %s76, %s77
      %p88 = scmp.eq.s32.totalorder %s28, 0
      %p89 = por %p87, %p88
      %p90 = scmp.ne.s32.totalorder %s76, %s77
      %p91 = scmp.eq.s32.totalorder %s29, 3
      %p92 = por %p90, %p91
      %p94 = scmp.ne.s32.totalorder %s77, %s93
      %p95 = scmp.eq.s32.totalorder %s29, 0
      %p96 = por %p94, %p95
      %s98 = sadd.s32 %s97, 1
      %p101 = scmp.eq.s32.totalorder %s23, 3
      %p102 = scmp.ne.s32.totalorder %s97, %s99
      %p103 = scmp.eq.s32.totalorder %s23, 0
      %p104 = por %p102, %p103
      %p105 = scmp.ne.s32.totalorder %s97, %s99
      %p106 = scmp.eq.s32.totalorder %s28, 3
      %p107 = por %p105, %p106
      %p108 = scmp.ne.s32.totalorder %s99, %s100
      %p109 = scmp.eq.s32.totalorder %s28, 0
      %p110 = por %p108, %p109
      %p111 = scmp.ne.s32.totalorder %s99, %s100
      %p112 = scmp.eq.s32.totalorder %s29, 3
      %p113 = por %p111, %p112
      %p115 = scmp.ne.s32.totalorder %s100, %s114
      %p116 = scmp.eq.s32.totalorder %s29, 0
      %p117 = por %p115, %p116
      %s119 = sadd.s32 %s118, 1
      %p122 = scmp.eq.s32.totalorder %s23, 3
      %p123 = scmp.ne.s32.totalorder %s118, %s120
      %p124 = scmp.eq.s32.totalorder %s23, 0
      %p125 = por %p123, %p124
      %p126 = scmp.ne.s32.totalorder %s118, %s120
      %p127 = scmp.eq.s32.totalorder %s28, 3
      %p128 = por %p126, %p127
      %p129 = scmp.ne.s32.totalorder %s120, %s121
      %p130 = scmp.eq.s32.totalorder %s28, 0
      %p131 = por %p129, %p130
      %p132 = scmp.ne.s32.totalorder %s120, %s121
      %p133 = scmp.eq.s32.totalorder %s29, 3
      %p134 = por %p132, %p133
      %p136 = scmp.ne.s32.totalorder %s121, %s135
      %p137 = scmp.eq.s32.totalorder %s29, 0
      %p138 = por %p136, %p137
      %s140 = sadd.s32 %s139, 1
      %p143 = scmp.eq.s32.totalorder %s23, 3
      %p144 = scmp.ne.s32.totalorder %s139, %s141
      %p145 = scmp.eq.s32.totalorder %s23, 0
      %p146 = por %p144, %p145
      %p147 = scmp.ne.s32.totalorder %s139, %s141
      %p148 = scmp.eq.s32.totalorder %s28, 3
      %p149 = por %p147, %p148
      %p150 = scmp.ne.s32.totalorder %s141, %s142
      %p151 = scmp.eq.s32.totalorder %s28, 0
      %p152 = por %p150, %p151
      %p153 = scmp.ne.s32.totalorder %s141, %s142
      %p154 = scmp.eq.s32.totalorder %s29, 3
      %p155 = por %p153, %p154
      %p157 = scmp.ne.s32.totalorder %s142, %s156
      %p158 = scmp.eq.s32.totalorder %s29, 0
      %p159 = por %p157, %p158
      %s161 = sadd.s32 %s160, 1
      %p164 = scmp.eq.s32.totalorder %s23, 3
      %p165 = scmp.ne.s32.totalorder %s160, %s162
      %p166 = scmp.eq.s32.totalorder %s23, 0
      %p167 = por %p165, %p166
      %p168 = scmp.ne.s32.totalorder %s160, %s162
      %p169 = scmp.eq.s32.totalorder %s28, 3
      %p170 = por %p168, %p169
      %p171 = scmp.ne.s32.totalorder %s162, %s163
      %p172 = scmp.eq.s32.totalorder %s28, 0
      %p173 = por %p171, %p172
      %p174 = scmp.ne.s32.totalorder %s162, %s163
      %p175 = scmp.eq.s32.totalorder %s29, 3
      %p176 = por %p174, %p175
      %p178 = scmp.ne.s32.totalorder %s163, %s177
      %p179 = scmp.eq.s32.totalorder %s29, 0
      %p180 = por %p178, %p179
      %s182 = sadd.s32 %s181, 1
      %p185 = scmp.eq.s32.totalorder %s23, 3
      %p186 = scmp.ne.s32.totalorder %s181, %s183
      %p187 = scmp.eq.s32.totalorder %s23, 0
      %p188 = por %p186, %p187
      %p189 = scmp.ne.s32.totalorder %s181, %s183
      %p190 = scmp.eq.s32.totalorder %s28, 3
      %p191 = por %p189, %p190
      %p192 = scmp.ne.s32.totalorder %s183, %s184
      %p193 = scmp.eq.s32.totalorder %s28, 0
      %p194 = por %p192, %p193
      %p195 = scmp.ne.s32.totalorder %s183, %s184
      %p196 = scmp.eq.s32.totalorder %s29, 3
      %p197 = por %p195, %p196
      %p199 = scmp.ne.s32.totalorder %s184, %s198
      %p200 = scmp.eq.s32.totalorder %s29, 0
      %p201 = por %p199, %p200
      %s202 = ssub.s32 %s30, %s42
      %s203 = ssub.s32 %s31, %s38
      %s204 = sor.u32 %s202, %s203
      %p205 = scmp.eq.s32.totalorder %s204, 0
      %s207 = sadd.s32 %s206, 1
      %s208 = scalar_select %p205, %s206, %s207
      %p211 = pneg %p205
      %p212 = scmp.eq.s32.totalorder %s23, 3
      %p213 = por %p211, %p212
      %p214 = scmp.ne.s32.totalorder %s206, %s209
      %p215 = scmp.eq.s32.totalorder %s23, 0
      %p216 = por %p214, %p215
      %p217 = scmp.ne.s32.totalorder %s206, %s209
      %p218 = scmp.eq.s32.totalorder %s28, 3
      %p219 = por %p217, %p218
      %p220 = scmp.ne.s32.totalorder %s209, %s210
      %p221 = scmp.eq.s32.totalorder %s28, 0
      %p222 = por %p220, %p221
      %p223 = scmp.ne.s32.totalorder %s209, %s210
      %p224 = scmp.eq.s32.totalorder %s29, 3
      %p225 = por %p223, %p224
      %p227 = scmp.ne.s32.totalorder %s210, %s226
      %p228 = scmp.eq.s32.totalorder %s29, 0
      %p229 = por %p227, %p228
      %p230 = scmp.le.s32.totalorder 1, %s23
      %p231 = scmp.lt.s32.totalorder %s23, 5
      %p232 = pnand %p230, %p231
      %p233 = pneg %p232
      // Predicated region
      $region9: #{tpu_custom_call.1} parent=5 // pred_check
        _
      $region10: #{tpu_custom_call.1} parent=5 // pred_check_branch
        %235 = sbr.rel (%p232) target = $region12
      $region11: #{tpu_custom_call.1} parent=5 // pred_region
        %s236 = ssub.s32 %s23, 1
        // Predicated region
        $region13: #{tpu_custom_call.1} parent=11 // pred_check
          %p237 = pneg %p110
        $region14: #{tpu_custom_call.1} parent=11 // pred_check_branch
          %239 = sbr.rel (%p237) target = $region16
        $region15: #{tpu_custom_call.1} parent=11 // pred_region
          _
        $region16: #{tpu_custom_call.1} parent=11 // pred_fallthru
          _
        // Predicated region
        $region17: #{tpu_custom_call.1} parent=11 // pred_check
          %p240 = pneg %p131
        $region18: #{tpu_custom_call.1} parent=11 // pred_check_branch
          %242 = sbr.rel (%p240) target = $region20
        $region19: #{tpu_custom_call.1} parent=11 // pred_region
          _
        $region20: #{tpu_custom_call.1} parent=11 // pred_fallthru
          _
        // Predicated region
        $region21: #{tpu_custom_call.1} parent=11 // pred_check
          %p243 = pneg %p152
        $region22: #{tpu_custom_call.1} parent=11 // pred_check_branch
          %245 = sbr.rel (%p243) target = $region24
        $region23: #{tpu_custom_call.1} parent=11 // pred_region
          _
        $region24: #{tpu_custom_call.1} parent=11 // pred_fallthru
          _
        // Predicated region
        $region25: #{tpu_custom_call.1} parent=11 // pred_check
          %p246 = pneg %p173
        $region26: #{tpu_custom_call.1} parent=11 // pred_check_branch
          %248 = sbr.rel (%p246) target = $region28
        $region27: #{tpu_custom_call.1} parent=11 // pred_region
          _
        $region28: #{tpu_custom_call.1} parent=11 // pred_fallthru
          _
        // Predicated region
        $region29: #{tpu_custom_call.1} parent=11 // pred_check
          %p249 = pneg %p194
        $region30: #{tpu_custom_call.1} parent=11 // pred_check_branch
          %251 = sbr.rel (%p249) target = $region32
        $region31: #{tpu_custom_call.1} parent=11 // pred_region
          _
        $region32: #{tpu_custom_call.1} parent=11 // pred_fallthru
          _
      $region12: #{tpu_custom_call.1} parent=5 // pred_fallthru
        _
      %p252 = scmp.lt.s32.totalorder %s23, 4
      // Predicated region
      $region33: #{tpu_custom_call.1} parent=5 // pred_check
        %p253 = pneg %p252
      $region34: #{tpu_custom_call.1} parent=5 // pred_check_branch
        %255 = sbr.rel (%p253) target = $region36
      $region35: #{tpu_custom_call.1} parent=5 // pred_region
        // Predicated region
        $region37: #{tpu_custom_call.1} parent=35 // pred_check
          %p256 = pneg %p57
        $region38: #{tpu_custom_call.1} parent=35 // pred_check_branch
          %258 = sbr.rel (%p256) target = $region40
        $region39: #{tpu_custom_call.1} parent=35 // pred_region
          %s259 = sand.u32 %s47, 1
          %s260 = scalar_lea.sflag [#allocation4], %s259
          %s261 = sand.u32 %s47, 1
          %s262 = smul.addr %s261, 16
          %s263 = scalar_lea.vmem [#allocation3], %s262
          %s265 = ssub.s32 256, 256
          %266 = vsyncadd %s260, %s265
          %s267 = smul.addr %s30, 4
          %s268 = sadd.s32 %s31, %s267
          %s269 = smul.addr %s268, 128
          %s270 = scalar_lea.hbm %s0, %s269
          %s271 = sshll.u32 %s263, 4
          %s272 = int_to_ptr.vmem [resolvable:$true] %s271
          %277 = dma.hbm_to_vmem [thread:$0]  %s270, 256, %s272, %s260, 256, 128, 8
        $region40: #{tpu_custom_call.1} parent=35 // pred_fallthru
          _
        // Predicated region
        $region41: #{tpu_custom_call.1} parent=35 // pred_check
          %p278 = pneg %p83
        $region42: #{tpu_custom_call.1} parent=35 // pred_check_branch
          %280 = sbr.rel (%p278) target = $region44
        $region43: #{tpu_custom_call.1} parent=35 // pred_region
          %s281 = sand.u32 %s73, 1
          %s282 = scalar_lea.sflag [#allocation7], %s281
          %s283 = sand.u32 %s73, 1
          %s284 = smul.addr %s283, 32
          %s285 = scalar_lea.vmem [#allocation6], %s284
          %s287 = ssub.s32 512, 512
          %288 = vsyncadd %s282, %s287
          %s289 = smul.addr %s30, 4
          %s290 = smul.addr %s289, 128
          %s291 = scalar_lea.hbm %s1, %s290
          %s292 = sshll.u32 %s285, 4
          %s293 = int_to_ptr.vmem [resolvable:$true] %s292
          %298 = dma.hbm_to_vmem [thread:$0]  %s291, 512, %s293, %s282, 256, 256, 16
        $region44: #{tpu_custom_call.1} parent=35 // pred_fallthru
          _
      $region36: #{tpu_custom_call.1} parent=5 // pred_fallthru
        _
      %p299 = scmp.le.s32.totalorder 1, %s23
      %p300 = scmp.lt.s32.totalorder %s23, 5
      %p301 = pnand %p299, %p300
      %p302 = pneg %p301
      // Predicated region
      $region45: #{tpu_custom_call.1} parent=5 // pred_check
        _
      $region46: #{tpu_custom_call.1} parent=5 // pred_check_branch
        %304 = sbr.rel (%p301) target = $region48
      $region47: #{tpu_custom_call.1} parent=5 // pred_region
        %s305 = ssub.s32 %s23, 1
        %s306 = sand.u32 %s50, 1
        %s307 = scalar_lea.sflag [#allocation4], %s306
        %s308 = sand.u32 %s50, 1
        %s309 = smul.addr %s308, 16
        %s310 = scalar_lea.vmem [#allocation3], %s309
        // Predicated region
        $region49: #{tpu_custom_call.1} parent=47 // pred_check
          %p311 = pneg %p63
        $region50: #{tpu_custom_call.1} parent=47 // pred_check_branch
          %313 = sbr.rel (%p311) target = $region52
        $region51: #{tpu_custom_call.1} parent=47 // pred_region
          %314 = dma.done %s307, 256
        $region52: #{tpu_custom_call.1} parent=47 // pred_fallthru
          _
        %s315 = sand.u32 %s76, 1
        %s316 = scalar_lea.sflag [#allocation7], %s315
        %s317 = sand.u32 %s76, 1
        %s318 = smul.addr %s317, 32
        %s319 = scalar_lea.vmem [#allocation6], %s318
        // Predicated region
        $region53: #{tpu_custom_call.1} parent=47 // pred_check
          %p320 = pneg %p89
        $region54: #{tpu_custom_call.1} parent=47 // pred_check_branch
          %322 = sbr.rel (%p320) target = $region56
        $region55: #{tpu_custom_call.1} parent=47 // pred_region
          %323 = dma.done %s316, 512
        $region56: #{tpu_custom_call.1} parent=47 // pred_fallthru
          _
        %s324 = sand.u32 %s50, 1
        %s325 = scalar_lea.sflag [#allocation4], %s324
        %s326 = sand.u32 %s50, 1
        %s327 = smul.addr %s326, 16
        %s328 = scalar_lea.vmem [#allocation3], %s327
        %p329 = pneg %p63
        %p330 = pneg %p60
        %s331 = sand.u32 %s76, 1
        %s332 = scalar_lea.sflag [#allocation7], %s331
        %s333 = sand.u32 %s76, 1
        %s334 = smul.addr %s333, 32
        %s335 = scalar_lea.vmem [#allocation6], %s334
        %p336 = pneg %p89
        %p337 = pneg %p86
        %p338 = pneg %p110
        %p339 = pneg %p107
        %p340 = pneg %p131
        %p341 = pneg %p128
        %p342 = pneg %p152
        %p343 = pneg %p149
        %p344 = pneg %p173
        %p345 = pneg %p170
        %p346 = pneg %p194
        %p347 = pneg %p191
        %p348 = pneg %p222
        %p349 = pneg %p219
        %s350 = sand.u32 %s209, 1
        %s351 = scalar_lea.sflag [#allocation5], %s350
        %s352 = sand.u32 %s209, 1
        %s353 = smul.addr %s352, 16
        %s354 = scalar_lea.vmem [#allocation8], %s353
        %v356 = vld [vmem:[%s310] sm:$0xff]
        %v357 = vld [vmem:[%s310 + $0x8] sm:$0xff]
        %v358 = vld [vmem:[%s319] sm:$0xff]
        %v359 = vld [vmem:[%s319 + $0x8] sm:$0xff]
        %v360 = vld [vmem:[%s319 + $0x10] sm:$0xff]
        %v361 = vld [vmem:[%s319 + $0x18] sm:$0xff]
        %v362 = vpack.c.bf16 %v360, %v358
        %v363 = vpack.c.bf16 %v361, %v359
        %364 = vxpose.xlu0.b32.start [1/16] %v356, 128
        %365 = vxpose.xlu0.b32.cont [2/16] %v357, 128
        %366 = vxpose.xlu0.b32.cont [3/16] 0.0, 128
        %367 = vxpose.xlu0.b32.cont [4/16] 0.0, 128
        %368 = vxpose.xlu0.b32.cont [5/16] 0.0, 128
        %369 = vxpose.xlu0.b32.cont [6/16] 0.0, 128
        %370 = vxpose.xlu0.b32.cont [7/16] 0.0, 128
        %371 = vxpose.xlu0.b32.cont [8/16] 0.0, 128
        %372 = vxpose.xlu0.b32.cont [9/16] 0.0, 128
        %373 = vxpose.xlu0.b32.cont [10/16] 0.0, 128
        %374 = vxpose.xlu0.b32.cont [11/16] 0.0, 128
        %375 = vxpose.xlu0.b32.cont [12/16] 0.0, 128
        %376 = vxpose.xlu0.b32.cont [13/16] 0.0, 128
        %377 = vxpose.xlu0.b32.cont [14/16] 0.0, 128
        %378 = vxpose.xlu0.b32.cont [15/16] 0.0, 128
        %379 = vxpose.xlu0.b32.end [16/16] 0.0, 128
        %v380 = vpop.trf.xlu0
        %v381 = vpop.trf.xlu0
        %v382 = vpop.trf.xlu0
        %v383 = vpop.trf.xlu0
        %v384 = vpop.trf.xlu0
        %v385 = vpop.trf.xlu0
        %v386 = vpop.trf.xlu0
        %v387 = vpop.trf.xlu0
        %v388 = vpop.trf.xlu0
        %v389 = vpop.trf.xlu0
        %v390 = vpop.trf.xlu0
        %v391 = vpop.trf.xlu0
        %v392 = vpop.trf.xlu0
        %v393 = vpop.trf.xlu0
        %v394 = vpop.trf.xlu0
        %v395 = vpop.trf.xlu0
        %v396 = vpack.c.bf16 %v381, %v380
        %v397 = vpack.c.bf16 %v383, %v382
        %v398 = vpack.c.bf16 %v385, %v384
        %v399 = vpack.c.bf16 %v387, %v386
        %v400 = vpack.c.bf16 %v389, %v388
        %v401 = vpack.c.bf16 %v391, %v390
        %v402 = vpack.c.bf16 %v393, %v392
        %v403 = vpack.c.bf16 %v395, %v394
        %v404 = vld [vmem:[%s2] sm:$0xf]
        %v405 = vld [vmem:[%s2 + $0x4] sm:$0xf]
        %v406 = vld [vmem:[%s3] sm:$0x1]
        %v408 = vlaneseq
        %v409 = vshrl.u32 %v408, 7
        %v410 = vsub.s32 0, %v409
        %v411 = vrot.slane %v406, %v410
        %v415 = vunpack.c.l.b16 %v404
        %v416 = vunpack.c.l.b16 %v405
        %v417 = vpack.c.b16 %v416, %v415
        %vm419 = vcmask 130048
        %v421 = vsel %vm419, %v396, 0
        %v424 = vsel %vm419, %v397, 0
        %v427 = vsel %vm419, %v398, 0
        %v430 = vsel %vm419, %v399, 0
        %v433 = vsel %vm419, %v400, 0
        %v436 = vsel %vm419, %v401, 0
        %v439 = vsel %vm419, %v402, 0
        %v442 = vsel %vm419, %v403, 0
        %444 = vmatprep.subr.bf16.mxu0 0
        %445 = vmatpush1.bf16.msra.mxu0 0
        %446 = vmatprep.subr.bf16.mxu0 0
        %447 = vmatpush1.bf16.msra.mxu0 0
        %448 = vmatprep.subr.bf16.mxu0 0
        %449 = vmatpush1.bf16.msra.mxu0 0
        %450 = vmatprep.subr.bf16.mxu0 0
        %451 = vmatpush1.bf16.msra.mxu0 0
        %452 = vmatprep.subr.bf16.mxu0 0
        %453 = vmatpush1.bf16.msra.mxu0 0
        %454 = vmatprep.subr.bf16.mxu0 0
        %455 = vmatpush1.bf16.msra.mxu0 0
        %456 = vmatprep.subr.bf16.mxu0 0
        %457 = vmatpush1.bf16.msra.mxu0 0
        %458 = vmatprep.subr.bf16.mxu0 0
        %459 = vmatpush1.bf16.msra.mxu0 %v417
        %460 = vmatprep.subr.bf16.mxu0 0
        %461 = vmatpush2.bf16.msra.mxu0 0
        %462 = vmatprep.subr.bf16.mxu0 0
        %463 = vmatpush2.bf16.msra.mxu0 0
        %464 = vmatprep.subr.bf16.mxu0 0
        %465 = vmatpush2.bf16.msra.mxu0 0
        %466 = vmatprep.subr.bf16.mxu0 0
        %467 = vmatpush2.bf16.msra.mxu0 0
        %468 = vmatprep.subr.bf16.mxu0 0
        %469 = vmatpush2.bf16.msra.mxu0 0
        %470 = vmatprep.subr.bf16.mxu0 0
        %471 = vmatpush2.bf16.msra.mxu0 0
        %472 = vmatprep.subr.bf16.mxu0 0
        %473 = vmatpush2.bf16.msra.mxu0 0
        %474 = vmatprep.subr.bf16.mxu0 0
        %475 = vmatpush2.bf16.msra.mxu0 0
        %476 = vmatprep.mubr.bf16.mxu0 0
        %477 = vmatmul.mubr.bf16.gmra.mxu0 %v421
        %v478 = vpop.f32.mrf.mxu0
        %v479 = vadd.f32 %v411, %v478
        %v480 = vpop.f32.mrf.mxu0
        %v481 = vpop.f32.mrf.mxu0
        %v482 = vadd.f32 %v411, %v481
        %v483 = vpop.f32.mrf.mxu0
        %484 = vmatprep.mubr.bf16.mxu0 0
        %485 = vmatmul.mubr.bf16.gmra.mxu0 %v424
        %v486 = vpop.f32.mrf.mxu0
        %v487 = vadd.f32 %v411, %v486
        %v488 = vpop.f32.mrf.mxu0
        %v489 = vpop.f32.mrf.mxu0
        %v490 = vadd.f32 %v411, %v489
        %v491 = vpop.f32.mrf.mxu0
        %492 = vmatprep.mubr.bf16.mxu0 0
        %493 = vmatmul.mubr.bf16.gmra.mxu0 %v427
        %v494 = vpop.f32.mrf.mxu0
        %v495 = vadd.f32 %v411, %v494
        %v496 = vpop.f32.mrf.mxu0
        %v497 = vpop.f32.mrf.mxu0
        %v498 = vadd.f32 %v411, %v497
        %v499 = vpop.f32.mrf.mxu0
        %500 = vmatprep.mubr.bf16.mxu0 0
        %501 = vmatmul.mubr.bf16.gmra.mxu0 %v430
        %v502 = vpop.f32.mrf.mxu0
        %v503 = vadd.f32 %v411, %v502
        %v504 = vpop.f32.mrf.mxu0
        %v505 = vpop.f32.mrf.mxu0
        %v506 = vadd.f32 %v411, %v505
        %v507 = vpop.f32.mrf.mxu0
        %508 = vmatprep.mubr.bf16.mxu0 0
        %509 = vmatmul.mubr.bf16.gmra.mxu0 %v433
        %v510 = vpop.f32.mrf.mxu0
        %v511 = vadd.f32 %v411, %v510
        %v512 = vpop.f32.mrf.mxu0
        %v513 = vpop.f32.mrf.mxu0
        %v514 = vadd.f32 %v411, %v513
        %v515 = vpop.f32.mrf.mxu0
        %516 = vmatprep.mubr.bf16.mxu0 0
        %517 = vmatmul.mubr.bf16.gmra.mxu0 %v436
        %v518 = vpop.f32.mrf.mxu0
        %v519 = vadd.f32 %v411, %v518
        %v520 = vpop.f32.mrf.mxu0
        %v521 = vpop.f32.mrf.mxu0
        %v522 = vadd.f32 %v411, %v521
        %v523 = vpop.f32.mrf.mxu0
        %524 = vmatprep.mubr.bf16.mxu0 0
        %525 = vmatmul.mubr.bf16.gmra.mxu0 %v439
        %v526 = vpop.f32.mrf.mxu0
        %v527 = vadd.f32 %v411, %v526
        %v528 = vpop.f32.mrf.mxu0
        %v529 = vpop.f32.mrf.mxu0
        %v530 = vadd.f32 %v411, %v529
        %v531 = vpop.f32.mrf.mxu0
        %532 = vmatprep.mubr.bf16.mxu0 0
        %533 = vmatmul.mubr.bf16.gmra.mxu0 %v442
        %v534 = vpop.f32.mrf.mxu0
        %v535 = vadd.f32 %v411, %v534
        %v536 = vpop.f32.mrf.mxu0
        %v537 = vpop.f32.mrf.mxu0
        %v538 = vadd.f32 %v411, %v537
        %v539 = vpop.f32.mrf.mxu0
        %540 = vdwg.mxu0
        %v541 = vpack.c.bf16 %v482, %v479
        %v542 = vpack.c.bf16 %v490, %v487
        %v543 = vpack.c.bf16 %v498, %v495
        %v544 = vpack.c.bf16 %v506, %v503
        %v545 = vpack.c.bf16 %v514, %v511
        %v546 = vpack.c.bf16 %v522, %v519
        %v547 = vpack.c.bf16 %v530, %v527
        %v548 = vpack.c.bf16 %v538, %v535
        %v550 = vsel %vm419, %v541, 0
        %v553 = vsel %vm419, %v542, 0
        %v556 = vsel %vm419, %v543, 0
        %v559 = vsel %vm419, %v544, 0
        %v562 = vsel %vm419, %v545, 0
        %v565 = vsel %vm419, %v546, 0
        %v568 = vsel %vm419, %v547, 0
        %v571 = vsel %vm419, %v548, 0
        %573 = vmatprep.subr.bf16.mxu0 0
        %574 = vmatpush1.bf16.msra.mxu0 0
        %575 = vmatprep.subr.bf16.mxu0 0
        %576 = vmatpush1.bf16.msra.mxu0 0
        %577 = vmatprep.subr.bf16.mxu0 0
        %578 = vmatpush1.bf16.msra.mxu0 0
        %579 = vmatprep.subr.bf16.mxu0 0
        %580 = vmatpush1.bf16.msra.mxu0 0
        %581 = vmatprep.subr.bf16.mxu0 0
        %582 = vmatpush1.bf16.msra.mxu0 0
        %583 = vmatprep.subr.bf16.mxu0 0
        %584 = vmatpush1.bf16.msra.mxu0 0
        %585 = vmatprep.subr.bf16.mxu0 0
        %586 = vmatpush1.bf16.msra.mxu0 0
        %587 = vmatprep.subr.bf16.mxu0 %v363
        %588 = vmatpush1.bf16.msra.mxu0 %v362
        %589 = vmatprep.subr.bf16.mxu0 0
        %590 = vmatpush2.bf16.msra.mxu0 0
        %591 = vmatprep.subr.bf16.mxu0 0
        %592 = vmatpush2.bf16.msra.mxu0 0
        %593 = vmatprep.subr.bf16.mxu0 0
        %594 = vmatpush2.bf16.msra.mxu0 0
        %595 = vmatprep.subr.bf16.mxu0 0
        %596 = vmatpush2.bf16.msra.mxu0 0
        %597 = vmatprep.subr.bf16.mxu0 0
        %598 = vmatpush2.bf16.msra.mxu0 0
        %599 = vmatprep.subr.bf16.mxu0 0
        %600 = vmatpush2.bf16.msra.mxu0 0
        %601 = vmatprep.subr.bf16.mxu0 0
        %602 = vmatpush2.bf16.msra.mxu0 0
        %603 = vmatprep.subr.bf16.mxu0 0
        %604 = vmatpush2.bf16.msra.mxu0 0
        %605 = vmatprep.mubr.bf16.mxu0 0
        %606 = vmatmul.mubr.bf16.gmra.mxu0 %v550
        %v607 = vpop.f32.mrf.mxu0
        %v608 = vadd.f32 0.0, %v607
        %v609 = vpop.f32.mrf.mxu0
        %v610 = vadd.f32 0.0, %v609
        %v611 = vpop.f32.mrf.mxu0
        %v612 = vadd.f32 0.0, %v611
        %v613 = vpop.f32.mrf.mxu0
        %v614 = vadd.f32 0.0, %v613
        %615 = vmatprep.mubr.bf16.mxu0 0
        %616 = vmatmul.mubr.bf16.gmra.mxu0 %v553
        %v617 = vpop.f32.mrf.mxu0
        %v618 = vadd.f32 0.0, %v617
        %v619 = vpop.f32.mrf.mxu0
        %v620 = vadd.f32 0.0, %v619
        %v621 = vpop.f32.mrf.mxu0
        %v622 = vadd.f32 0.0, %v621
        %v623 = vpop.f32.mrf.mxu0
        %v624 = vadd.f32 0.0, %v623
        %625 = vmatprep.mubr.bf16.mxu0 0
        %626 = vmatmul.mubr.bf16.gmra.mxu0 %v556
        %v627 = vpop.f32.mrf.mxu0
        %v628 = vadd.f32 0.0, %v627
        %v629 = vpop.f32.mrf.mxu0
        %v630 = vadd.f32 0.0, %v629
        %v631 = vpop.f32.mrf.mxu0
        %v632 = vadd.f32 0.0, %v631
        %v633 = vpop.f32.mrf.mxu0
        %v634 = vadd.f32 0.0, %v633
        %635 = vmatprep.mubr.bf16.mxu0 0
        %636 = vmatmul.mubr.bf16.gmra.mxu0 %v559
        %v637 = vpop.f32.mrf.mxu0
        %v638 = vadd.f32 0.0, %v637
        %v639 = vpop.f32.mrf.mxu0
        %v640 = vadd.f32 0.0, %v639
        %v641 = vpop.f32.mrf.mxu0
        %v642 = vadd.f32 0.0, %v641
        %v643 = vpop.f32.mrf.mxu0
        %v644 = vadd.f32 0.0, %v643
        %645 = vmatprep.mubr.bf16.mxu0 0
        %646 = vmatmul.mubr.bf16.gmra.mxu0 %v562
        %v647 = vpop.f32.mrf.mxu0
        %v648 = vadd.f32 0.0, %v647
        %v649 = vpop.f32.mrf.mxu0
        %v650 = vadd.f32 0.0, %v649
        %v651 = vpop.f32.mrf.mxu0
        %v652 = vadd.f32 0.0, %v651
        %v653 = vpop.f32.mrf.mxu0
        %v654 = vadd.f32 0.0, %v653
        %655 = vmatprep.mubr.bf16.mxu0 0
        %656 = vmatmul.mubr.bf16.gmra.mxu0 %v565
        %v657 = vpop.f32.mrf.mxu0
        %v658 = vadd.f32 0.0, %v657
        %v659 = vpop.f32.mrf.mxu0
        %v660 = vadd.f32 0.0, %v659
        %v661 = vpop.f32.mrf.mxu0
        %v662 = vadd.f32 0.0, %v661
        %v663 = vpop.f32.mrf.mxu0
        %v664 = vadd.f32 0.0, %v663
        %665 = vmatprep.mubr.bf16.mxu0 0
        %666 = vmatmul.mubr.bf16.gmra.mxu0 %v568
        %v667 = vpop.f32.mrf.mxu0
        %v668 = vadd.f32 0.0, %v667
        %v669 = vpop.f32.mrf.mxu0
        %v670 = vadd.f32 0.0, %v669
        %v671 = vpop.f32.mrf.mxu0
        %v672 = vadd.f32 0.0, %v671
        %v673 = vpop.f32.mrf.mxu0
        %v674 = vadd.f32 0.0, %v673
        %675 = vmatprep.mubr.bf16.mxu0 0
        %676 = vmatmul.mubr.bf16.gmra.mxu0 %v571
        %v677 = vpop.f32.mrf.mxu0
        %v678 = vadd.f32 0.0, %v677
        %v679 = vpop.f32.mrf.mxu0
        %v680 = vadd.f32 0.0, %v679
        %v681 = vpop.f32.mrf.mxu0
        %v682 = vadd.f32 0.0, %v681
        %v683 = vpop.f32.mrf.mxu0
        %v684 = vadd.f32 0.0, %v683
        %685 = vdwg.mxu0
        %v686 = vmax.f32 %v608, %v610
        %687 = vmax.xlane.f32.xlu0 %v686
        %v688 = vpop.xlane.xlu0 %687
        %v689 = vmax.f32 %v612, %v614
        %690 = vmax.xlane.f32.xlu0 %v689
        %v691 = vpop.xlane.xlu0 %690
        %v692 = vmax.f32 %v618, %v620
        %693 = vmax.xlane.f32.xlu0 %v692
        %v694 = vpop.xlane.xlu0 %693
        %v695 = vmax.f32 %v622, %v624
        %696 = vmax.xlane.f32.xlu0 %v695
        %v697 = vpop.xlane.xlu0 %696
        %v698 = vmax.f32 %v628, %v630
        %699 = vmax.xlane.f32.xlu0 %v698
        %v700 = vpop.xlane.xlu0 %699
        %v701 = vmax.f32 %v632, %v634
        %702 = vmax.xlane.f32.xlu0 %v701
        %v703 = vpop.xlane.xlu0 %702
        %v704 = vmax.f32 %v638, %v640
        %705 = vmax.xlane.f32.xlu0 %v704
        %v706 = vpop.xlane.xlu0 %705
        %v707 = vmax.f32 %v642, %v644
        %708 = vmax.xlane.f32.xlu0 %v707
        %v709 = vpop.xlane.xlu0 %708
        %v710 = vmax.f32 %v648, %v650
        %711 = vmax.xlane.f32.xlu0 %v710
        %v712 = vpop.xlane.xlu0 %711
        %v713 = vmax.f32 %v652, %v654
        %714 = vmax.xlane.f32.xlu0 %v713
        %v715 = vpop.xlane.xlu0 %714
        %v716 = vmax.f32 %v658, %v660
        %717 = vmax.xlane.f32.xlu0 %v716
        %v718 = vpop.xlane.xlu0 %717
        %v719 = vmax.f32 %v662, %v664
        %720 = vmax.xlane.f32.xlu0 %v719
        %v721 = vpop.xlane.xlu0 %720
        %v722 = vmax.f32 %v668, %v670
        %723 = vmax.xlane.f32.xlu0 %v722
        %v724 = vpop.xlane.xlu0 %723
        %v725 = vmax.f32 %v672, %v674
        %726 = vmax.xlane.f32.xlu0 %v725
        %v727 = vpop.xlane.xlu0 %726
        %v728 = vmax.f32 %v678, %v680
        %729 = vmax.xlane.f32.xlu0 %v728
        %v730 = vpop.xlane.xlu0 %729
        %v731 = vmax.f32 %v682, %v684
        %732 = vmax.xlane.f32.xlu0 %v731
        %v733 = vpop.xlane.xlu0 %732
        %v734 = vsub.f32 %v608, %v688
        %v735 = vsub.f32 %v610, %v688
        %v736 = vsub.f32 %v612, %v691
        %v737 = vsub.f32 %v614, %v691
        %v738 = vsub.f32 %v618, %v694
        %v739 = vsub.f32 %v620, %v694
        %v740 = vsub.f32 %v622, %v697
        %v741 = vsub.f32 %v624, %v697
        %v742 = vsub.f32 %v628, %v700
        %v743 = vsub.f32 %v630, %v700
        %v744 = vsub.f32 %v632, %v703
        %v745 = vsub.f32 %v634, %v703
        %v746 = vsub.f32 %v638, %v706
        %v747 = vsub.f32 %v640, %v706
        %v748 = vsub.f32 %v642, %v709
        %v749 = vsub.f32 %v644, %v709
        %v750 = vsub.f32 %v648, %v712
        %v751 = vsub.f32 %v650, %v712
        %v752 = vsub.f32 %v652, %v715
        %v753 = vsub.f32 %v654, %v715
        %v754 = vsub.f32 %v658, %v718
        %v755 = vsub.f32 %v660, %v718
        %v756 = vsub.f32 %v662, %v721
        %v757 = vsub.f32 %v664, %v721
        %v758 = vsub.f32 %v668, %v724
        %v759 = vsub.f32 %v670, %v724
        %v760 = vsub.f32 %v672, %v727
        %v761 = vsub.f32 %v674, %v727
        %v762 = vsub.f32 %v678, %v730
        %v763 = vsub.f32 %v680, %v730
        %v764 = vsub.f32 %v682, %v733
        %v765 = vsub.f32 %v684, %v733
        %v766 = vmul.f32 %v734, 1.442695
        %v767 = vpow.pop %v766
        %v768 = vmul.f32 %v735, 1.442695
        %v769 = vpow.pop %v768
        %v770 = vmul.f32 %v736, 1.442695
        %v771 = vpow.pop %v770
        %v772 = vmul.f32 %v737, 1.442695
        %v773 = vpow.pop %v772
        %v774 = vmul.f32 %v738, 1.442695
        %v775 = vpow.pop %v774
        %v776 = vmul.f32 %v739, 1.442695
        %v777 = vpow.pop %v776
        %v778 = vmul.f32 %v740, 1.442695
        %v779 = vpow.pop %v778
        %v780 = vmul.f32 %v741, 1.442695
        %v781 = vpow.pop %v780
        %v782 = vmul.f32 %v742, 1.442695
        %v783 = vpow.pop %v782
        %v784 = vmul.f32 %v743, 1.442695
        %v785 = vpow.pop %v784
        %v786 = vmul.f32 %v744, 1.442695
        %v787 = vpow.pop %v786
        %v788 = vmul.f32 %v745, 1.442695
        %v789 = vpow.pop %v788
        %v790 = vmul.f32 %v746, 1.442695
        %v791 = vpow.pop %v790
        %v792 = vmul.f32 %v747, 1.442695
        %v793 = vpow.pop %v792
        %v794 = vmul.f32 %v748, 1.442695
        %v795 = vpow.pop %v794
        %v796 = vmul.f32 %v749, 1.442695
        %v797 = vpow.pop %v796
        %v798 = vmul.f32 %v750, 1.442695
        %v799 = vpow.pop %v798
        %v800 = vmul.f32 %v751, 1.442695
        %v801 = vpow.pop %v800
        %v802 = vmul.f32 %v752, 1.442695
        %v803 = vpow.pop %v802
        %v804 = vmul.f32 %v753, 1.442695
        %v805 = vpow.pop %v804
        %v806 = vmul.f32 %v754, 1.442695
        %v807 = vpow.pop %v806
        %v808 = vmul.f32 %v755, 1.442695
        %v809 = vpow.pop %v808
        %v810 = vmul.f32 %v756, 1.442695
        %v811 = vpow.pop %v810
        %v812 = vmul.f32 %v757, 1.442695
        %v813 = vpow.pop %v812
        %v814 = vmul.f32 %v758, 1.442695
        %v815 = vpow.pop %v814
        %v816 = vmul.f32 %v759, 1.442695
        %v817 = vpow.pop %v816
        %v818 = vmul.f32 %v760, 1.442695
        %v819 = vpow.pop %v818
        %v820 = vmul.f32 %v761, 1.442695
        %v821 = vpow.pop %v820
        %v822 = vmul.f32 %v762, 1.442695
        %v823 = vpow.pop %v822
        %v824 = vmul.f32 %v763, 1.442695
        %v825 = vpow.pop %v824
        %v826 = vmul.f32 %v764, 1.442695
        %v827 = vpow.pop %v826
        %v828 = vmul.f32 %v765, 1.442695
        %v829 = vpow.pop %v828
        %v830 = vadd.f32 %v767, %v769
        %831 = vadd.xlane.f32.xlu0 %v830
        %v832 = vpop.xlane.xlu0 %831
        %v833 = vadd.f32 %v771, %v773
        %834 = vadd.xlane.f32.xlu0 %v833
        %v835 = vpop.xlane.xlu0 %834
        %v836 = vadd.f32 %v775, %v777
        %837 = vadd.xlane.f32.xlu0 %v836
        %v838 = vpop.xlane.xlu0 %837
        %v839 = vadd.f32 %v779, %v781
        %840 = vadd.xlane.f32.xlu0 %v839
        %v841 = vpop.xlane.xlu0 %840
        %v842 = vadd.f32 %v783, %v785
        %843 = vadd.xlane.f32.xlu0 %v842
        %v844 = vpop.xlane.xlu0 %843
        %v845 = vadd.f32 %v787, %v789
        %846 = vadd.xlane.f32.xlu0 %v845
        %v847 = vpop.xlane.xlu0 %846
        %v848 = vadd.f32 %v791, %v793
        %849 = vadd.xlane.f32.xlu0 %v848
        %v850 = vpop.xlane.xlu0 %849
        %v851 = vadd.f32 %v795, %v797
        %852 = vadd.xlane.f32.xlu0 %v851
        %v853 = vpop.xlane.xlu0 %852
        %v854 = vadd.f32 %v799, %v801
        %855 = vadd.xlane.f32.xlu0 %v854
        %v856 = vpop.xlane.xlu0 %855
        %v857 = vadd.f32 %v803, %v805
        %858 = vadd.xlane.f32.xlu0 %v857
        %v859 = vpop.xlane.xlu0 %858
        %v860 = vadd.f32 %v807, %v809
        %861 = vadd.xlane.f32.xlu0 %v860
        %v862 = vpop.xlane.xlu0 %861
        %v863 = vadd.f32 %v811, %v813
        %864 = vadd.xlane.f32.xlu0 %v863
        %v865 = vpop.xlane.xlu0 %864
        %v866 = vadd.f32 %v815, %v817
        %867 = vadd.xlane.f32.xlu0 %v866
        %v868 = vpop.xlane.xlu0 %867
        %v869 = vadd.f32 %v819, %v821
        %870 = vadd.xlane.f32.xlu0 %v869
        %v871 = vpop.xlane.xlu0 %870
        %v872 = vadd.f32 %v823, %v825
        %873 = vadd.xlane.f32.xlu0 %v872
        %v874 = vpop.xlane.xlu0 %873
        %v875 = vadd.f32 %v827, %v829
        %876 = vadd.xlane.f32.xlu0 %v875
        %v877 = vpop.xlane.xlu0 %876
        %v878 = vrcp.pop %v832
        %v879 = vrcp.pop %v835
        %v880 = vrcp.pop %v838
        %v881 = vrcp.pop %v841
        %v882 = vrcp.pop %v844
        %v883 = vrcp.pop %v847
        %v884 = vrcp.pop %v850
        %v885 = vrcp.pop %v853
        %v886 = vrcp.pop %v856
        %v887 = vrcp.pop %v859
        %v888 = vrcp.pop %v862
        %v889 = vrcp.pop %v865
        %v890 = vrcp.pop %v868
        %v891 = vrcp.pop %v871
        %v892 = vrcp.pop %v874
        %v893 = vrcp.pop %v877
        %v894 = vmul.f32 %v767, %v878
        %v895 = vmul.f32 %v769, %v878
        %v896 = vmul.f32 %v771, %v879
        %v897 = vmul.f32 %v773, %v879
        %v898 = vmul.f32 %v775, %v880
        %v899 = vmul.f32 %v777, %v880
        %v900 = vmul.f32 %v779, %v881
        %v901 = vmul.f32 %v781, %v881
        %v902 = vmul.f32 %v783, %v882
        %v903 = vmul.f32 %v785, %v882
        %v904 = vmul.f32 %v787, %v883
        %v905 = vmul.f32 %v789, %v883
        %v906 = vmul.f32 %v791, %v884
        %v907 = vmul.f32 %v793, %v884
        %v908 = vmul.f32 %v795, %v885
        %v909 = vmul.f32 %v797, %v885
        %v910 = vmul.f32 %v799, %v886
        %v911 = vmul.f32 %v801, %v886
        %v912 = vmul.f32 %v803, %v887
        %v913 = vmul.f32 %v805, %v887
        %v914 = vmul.f32 %v807, %v888
        %v915 = vmul.f32 %v809, %v888
        %v916 = vmul.f32 %v811, %v889
        %v917 = vmul.f32 %v813, %v889
        %v918 = vmul.f32 %v815, %v890
        %v919 = vmul.f32 %v817, %v890
        %v920 = vmul.f32 %v819, %v891
        %v921 = vmul.f32 %v821, %v891
        %v922 = vmul.f32 %v823, %v892
        %v923 = vmul.f32 %v825, %v892
        %v924 = vmul.f32 %v827, %v893
        %v925 = vmul.f32 %v829, %v893
        %v926 = vpack.c.bf16 %v896, %v894
        %v927 = vpack.c.bf16 %v897, %v895
        %v928 = vpack.c.bf16 %v900, %v898
        %v929 = vpack.c.bf16 %v901, %v899
        %v930 = vpack.c.bf16 %v904, %v902
        %v931 = vpack.c.bf16 %v905, %v903
        %v932 = vpack.c.bf16 %v908, %v906
        %v933 = vpack.c.bf16 %v909, %v907
        %v934 = vpack.c.bf16 %v912, %v910
        %v935 = vpack.c.bf16 %v913, %v911
        %v936 = vpack.c.bf16 %v916, %v914
        %v937 = vpack.c.bf16 %v917, %v915
        %v938 = vpack.c.bf16 %v920, %v918
        %v939 = vpack.c.bf16 %v921, %v919
        %v940 = vpack.c.bf16 %v924, %v922
        %v941 = vpack.c.bf16 %v925, %v923
        %942 = vmatprep.subr.bf16.mxu0 %v941
        %943 = vmatpush1.bf16.xpose.msra.mxu0 %v940
        %944 = vmatprep.subr.bf16.mxu0 %v939
        %945 = vmatpush1.bf16.xpose.msra.mxu0 %v938
        %946 = vmatprep.subr.bf16.mxu0 %v937
        %947 = vmatpush1.bf16.xpose.msra.mxu0 %v936
        %948 = vmatprep.subr.bf16.mxu0 %v935
        %949 = vmatpush1.bf16.xpose.msra.mxu0 %v934
        %950 = vmatprep.subr.bf16.mxu0 %v933
        %951 = vmatpush1.bf16.xpose.msra.mxu0 %v932
        %952 = vmatprep.subr.bf16.mxu0 %v931
        %953 = vmatpush1.bf16.xpose.msra.mxu0 %v930
        %954 = vmatprep.subr.bf16.mxu0 %v929
        %955 = vmatpush1.bf16.xpose.msra.mxu0 %v928
        %956 = vmatprep.subr.bf16.mxu0 %v927
        %957 = vmatpush1.bf16.xpose.msra.mxu0 %v926
        %958 = vmatprep.subr.bf16.mxu0 0
        %959 = vmatpush2.bf16.xpose.msra.mxu0 0
        %960 = vmatprep.subr.bf16.mxu0 0
        %961 = vmatpush2.bf16.xpose.msra.mxu0 0
        %962 = vmatprep.subr.bf16.mxu0 0
        %963 = vmatpush2.bf16.xpose.msra.mxu0 0
        %964 = vmatprep.subr.bf16.mxu0 0
        %965 = vmatpush2.bf16.xpose.msra.mxu0 0
        %966 = vmatprep.subr.bf16.mxu0 0
        %967 = vmatpush2.bf16.xpose.msra.mxu0 0
        %968 = vmatprep.subr.bf16.mxu0 0
        %969 = vmatpush2.bf16.xpose.msra.mxu0 0
        %970 = vmatprep.subr.bf16.mxu0 0
        %971 = vmatpush2.bf16.xpose.msra.mxu0 0
        %972 = vmatprep.subr.bf16.mxu0 0
        %973 = vmatpush2.bf16.xpose.msra.mxu0 0
        %974 = vmatprep.mubr.bf16.mxu0 %v363
        %975 = vmatmul.mubr.bf16.gmra.mxu0 %v362
        %v976 = vpop.f32.mrf.mxu0
        %v977 = vadd.f32 0.0, %v976
        %v978 = vpop.f32.mrf.mxu0
        %v979 = vpop.f32.mrf.mxu0
        %v980 = vadd.f32 0.0, %v979
        %v981 = vpop.f32.mrf.mxu0
        %982 = vdwg.mxu0
        %v983 = vld [vmem:[%s4] sm:$0xf]
        %v984 = vld [vmem:[%s4 + $0x4] sm:$0xf]
        %v985 = vpack.c.bf16 %v980, %v977
        %v986 = vld [vmem:[%s5] sm:$0xff]
        %v987 = vld [vmem:[%s5 + $0x8] sm:$0xff]
        %989 = vset.pattern.permute.xlu0 0
        %990 = vperm.xlu0 %989, %v986
        %v991 = vpop.permute.xlu0 %990
        %994 = vset.pattern.permute.xlu0 0
        %995 = vperm.xlu0 %994, %v987
        %v996 = vpop.permute.xlu0 %995
        %v1000 = vunpack.c.l.b16 %v983
        %v1001 = vunpack.c.l.b16 %v984
        %v1002 = vpack.c.b16 %v1001, %v1000
        %v1004 = vsel %vm419, %v1002, 0
        %1006 = vmatprep.subr.bf16.mxu0 0
        %1007 = vmatpush1.bf16.msra.mxu0 0
        %1008 = vmatprep.subr.bf16.mxu0 0
        %1009 = vmatpush1.bf16.msra.mxu0 0
        %1010 = vmatprep.subr.bf16.mxu0 0
        %1011 = vmatpush1.bf16.msra.mxu0 0
        %1012 = vmatprep.subr.bf16.mxu0 0
        %1013 = vmatpush1.bf16.msra.mxu0 0
        %1014 = vmatprep.subr.bf16.mxu0 0
        %1015 = vmatpush1.bf16.msra.mxu0 0
        %1016 = vmatprep.subr.bf16.mxu0 0
        %1017 = vmatpush1.bf16.msra.mxu0 0
        %1018 = vmatprep.subr.bf16.mxu0 0
        %1019 = vmatpush1.bf16.msra.mxu0 0
        %1020 = vmatprep.subr.bf16.mxu0 0
        %1021 = vmatpush1.bf16.msra.mxu0 %v985
        %1022 = vmatprep.subr.bf16.mxu0 0
        %1023 = vmatpush2.bf16.msra.mxu0 0
        %1024 = vmatprep.subr.bf16.mxu0 0
        %1025 = vmatpush2.bf16.msra.mxu0 0
        %1026 = vmatprep.subr.bf16.mxu0 0
        %1027 = vmatpush2.bf16.msra.mxu0 0
        %1028 = vmatprep.subr.bf16.mxu0 0
        %1029 = vmatpush2.bf16.msra.mxu0 0
        %1030 = vmatprep.subr.bf16.mxu0 0
        %1031 = vmatpush2.bf16.msra.mxu0 0
        %1032 = vmatprep.subr.bf16.mxu0 0
        %1033 = vmatpush2.bf16.msra.mxu0 0
        %1034 = vmatprep.subr.bf16.mxu0 0
        %1035 = vmatpush2.bf16.msra.mxu0 0
        %1036 = vmatprep.subr.bf16.mxu0 0
        %1037 = vmatpush2.bf16.msra.mxu0 0
        %1038 = vmatprep.mubr.bf16.mxu0 0
        %1039 = vmatmul.mubr.bf16.gmra.mxu0 %v1004
        %v1040 = vpop.f32.mrf.mxu0
        %v1041 = vadd.f32 %v991, %v1040
        %v1042 = vpop.f32.mrf.mxu0
        %v1043 = vpop.f32.mrf.mxu0
        %v1044 = vadd.f32 %v996, %v1043
        %v1045 = vpop.f32.mrf.mxu0
        %1046 = vdwg.mxu0
        %s1047 = sld [smem:[#allocation2]]
        %v1048 = vstv %s1047
        %v1049 = vmul.f32 %v1048, %v1041
        %v1050 = vmul.f32 %v1048, %v1044
        %v1051 = vadd.f32 %v1049, %v356
        %v1052 = vadd.f32 %v1050, %v357
        %1053 = vst [vmem:[%s354] sm:$0xff] %v1051
        %1054 = vst [vmem:[%s354 + $0x8] sm:$0xff] %v1052
        %s1055 = sand.u32 %s209, 1
        %s1056 = scalar_lea.sflag [#allocation5], %s1055
        %s1057 = sand.u32 %s209, 1
        %s1058 = smul.addr %s1057, 16
        %s1059 = scalar_lea.vmem [#allocation8], %s1058
        // Predicated region
        $region57: #{tpu_custom_call.1} parent=47 // pred_check
          %p1060 = pneg %p219
        $region58: #{tpu_custom_call.1} parent=47 // pred_check_branch
          %1062 = sbr.rel (%p1060) target = $region60
        $region59: #{tpu_custom_call.1} parent=47 // pred_region
          %s1064 = ssub.s32 256, 256
          %1065 = vsyncadd %s1056, %s1064
          %s1066 = smul.addr %s32, 4
          %s1067 = sadd.s32 %s33, %s1066
          %s1068 = smul.addr %s1067, 128
          %s1069 = scalar_lea.hbm %s7, %s1068
          %s1070 = sshll.u32 %s1059, 4
          %s1071 = int_to_ptr.vmem [resolvable:$true] %s1070
          %1076 = dma.vmem_to_hbm [thread:$0]  %s1071, 256, %s1069, %s1056, 128, 256, 8
        $region60: #{tpu_custom_call.1} parent=47 // pred_fallthru
          _
      $region48: #{tpu_custom_call.1} parent=5 // pred_fallthru
        _
      %p1077 = scmp.le.s32.totalorder 2, %s23
      // Predicated region
      $region61: #{tpu_custom_call.1} parent=5 // pred_check
        %p1078 = pneg %p1077
      $region62: #{tpu_custom_call.1} parent=5 // pred_check_branch
        %1080 = sbr.rel (%p1078) target = $region64
      $region63: #{tpu_custom_call.1} parent=5 // pred_region
        %s1081 = ssub.s32 %s23, 2
        // Predicated region
        $region65: #{tpu_custom_call.1} parent=63 // pred_check
          %p1082 = pneg %p225
        $region66: #{tpu_custom_call.1} parent=63 // pred_check_branch
          %1084 = sbr.rel (%p1082) target = $region68
        $region67: #{tpu_custom_call.1} parent=63 // pred_region
          %s1085 = sand.u32 %s210, 1
          %s1086 = scalar_lea.sflag [#allocation5], %s1085
          %s1087 = sand.u32 %s210, 1
          %s1088 = smul.addr %s1087, 16
          %s1089 = scalar_lea.vmem [#allocation8], %s1088
          %1090 = dma.done %s1086, 256
        $region68: #{tpu_custom_call.1} parent=63 // pred_fallthru
          _
      $region64: #{tpu_custom_call.1} parent=5 // pred_fallthru
        _
    $region6: #{tpu_custom_call.1} parent=1 // loop_footer
      %s27 = sadd.s32 1, %s23
    $region7: #{tpu_custom_call.1} parent=1 // loop_footer_branch
      %22 = sbr.rel target = $region3
    $region8: #{tpu_custom_call.1} parent=1 // loop_exit
      _
    %1091 = vsyncpa [#allocation4], 1
    %s1092 = scalar_lea.sflag [#allocation4], 1
    %1093 = vsyncpa %s1092, 1
    %1094 = vsyncpa [#allocation7], 1
    %s1095 = scalar_lea.sflag [#allocation7], 1
    %1096 = vsyncpa %s1095, 1
    %1097 = vsyncpa [#allocation5], 1
    %s1098 = scalar_lea.sflag [#allocation5], 1
    %1099 = vsyncpa %s1098, 1

</llo_original>
